<compile_context>
chip_gen: v7x
topology: tpu7x:2x2x1
jax: 0.10.0
libtpu: 0.0.40
codegen_flags: <defaults>
</compile_context>

<pallas_src>
import numpy as np

import jax
import jax.numpy as jnp
from jax import lax
from jax.experimental import pallas as pl
from jax.experimental.pallas import tpu as pltpu


# ---------------------------------------------------------------------------
# Kernels
# ---------------------------------------------------------------------------
def _features_avgpool_kernel(patches_ref, w_ref, b_ref, pool_ref, o_ref):
  """conv3x3 (+bias, +ReLU) as an im2col matmul, fused with adaptive avgpool.

  patches_ref: (1, H*W, 9*Cin)   im2col patches for one image
  w_ref:       (9*Cin, Cf)       conv weight (HWIO flattened)
  b_ref:       (1, Cf)           conv bias
  pool_ref:    (49, H*W)         AdaptiveAvgPool2d((7,7)) as a matrix
  o_ref:       (1, 49, Cf)       pooled feature map (spatial-flattened)
  """
  h = jnp.dot(patches_ref[0], w_ref[...], preferred_element_type=jnp.float32)
  h = jnp.maximum(h + b_ref[...], 0.0)                       # (H*W, Cf)
  o_ref[0] = jnp.dot(pool_ref[...], h,
                     preferred_element_type=jnp.float32).astype(o_ref.dtype)


def _classifier_heads_kernel(x_ref, w1_ref, b1_ref, w2_ref, b2_ref,
                             w3_ref, b3_ref, wh_ref, bh_ref, o_ref, acc_ref):
  """Fused classifier MLP + 9 packed heads.

  Grid: (batch [parallel], K-tiles of the flatten dim [arbitrary]).
  x_ref:  (1, 1, tk)   slice of the flattened pooled features
  w1_ref: (tk, H1)     K-tile of the first Linear
  acc_ref:(1, H1)      f32 accumulator for the first Linear
  On the last K step: bias+ReLU, Linear2+ReLU, Linear3, packed heads, store.
  """
  k = pl.program_id(1)

  @pl.when(k == 0)
  def _():
    acc_ref[...] = jnp.zeros_like(acc_ref)

  acc_ref[...] += jnp.dot(x_ref[0], w1_ref[...],
                          preferred_element_type=jnp.float32)

  @pl.when(k == pl.num_programs(1) - 1)
  def _():
    h1 = jnp.maximum(acc_ref[...] + b1_ref[...], 0.0)
    # TODO(synk): nn.Dropout is identity at inference; training-mode dropout
    # (pltpu PRNG) is not implemented.
    h2 = jnp.maximum(
        jnp.dot(h1, w2_ref[...], preferred_element_type=jnp.float32)
        + b2_ref[...], 0.0)
    feat = jnp.dot(h2, w3_ref[...],
                   preferred_element_type=jnp.float32) + b3_ref[...]
    y = jnp.dot(feat, wh_ref[...],
                preferred_element_type=jnp.float32) + bh_ref[...]
    o_ref[0] = y.astype(o_ref.dtype)


# ---------------------------------------------------------------------------
# Wrapper helpers
# ---------------------------------------------------------------------------
def _adaptive_avgpool_matrix(h, w, oh=7, ow=7):
  """Exact nn.AdaptiveAvgPool2d((oh, ow)) as a (oh*ow, h*w) matrix."""
  mat = np.zeros((oh * ow, h * w), np.float32)
  for i in range(oh):
    h0, h1 = (i * h) // oh, -((-(i + 1) * h) // oh)
    for j in range(ow):
      w0, w1 = (j * w) // ow, -((-(j + 1) * w) // ow)
      val = 1.0 / ((h1 - h0) * (w1 - w0))
      for hh in range(h0, h1):
        mat[i * ow + j, hh * w + w0:hh * w + w1] = val
  return jnp.asarray(mat)


def _pick_k_tile(feat_dim):
  """Largest split count giving 128-aligned K tiles (more pipeline steps)."""
  for splits in (16, 8, 7, 4, 2):
    if feat_dim % splits == 0 and (feat_dim // splits) % 128 == 0:
      return feat_dim // splits
  return feat_dim


# ---------------------------------------------------------------------------
# Public forward
# ---------------------------------------------------------------------------
def vgg_forward_pallas(x_nchw, params, *, num_classes=66):
  n, cin, hgt, wdt = x_nchw.shape
  c_feat = params["w_conv"].shape[-1]
  hidden = params["w1"].shape[1]
  last_channel = params["w3"].shape[1]
  n_heads_out = 9 * num_classes
  hw = hgt * wdt

  # ---- wrapper-side layout plumbing (XLA): NCHW->NHWC, zero-pad, im2col ----
  x = jnp.transpose(x_nchw, (0, 2, 3, 1))
  xp = jnp.pad(x, ((0, 0), (1, 1), (1, 1), (0, 0)))
  cols = [xp[:, dh:dh + hgt, dw:dw + wdt, :]
          for dh in range(3) for dw in range(3)]
  patches = jnp.concatenate(cols, axis=-1).reshape(n, hw, 9 * cin)
  w_conv = params["w_conv"].reshape(9 * cin, c_feat)
  pool_mat = _adaptive_avgpool_matrix(hgt, wdt, 7, 7)            # (49, H*W)

  # ---- kernel 1: features conv3x3+ReLU fused with adaptive avgpool ----
  pooled = pl.pallas_call(
      _features_avgpool_kernel,
      out_shape=jax.ShapeDtypeStruct((n, 49, c_feat), jnp.float32),
      grid=(n,),
      in_specs=[
          pl.BlockSpec((1, hw, 9 * cin), lambda i: (i, 0, 0)),
          pl.BlockSpec((9 * cin, c_feat), lambda i: (0, 0)),
          pl.BlockSpec((1, c_feat), lambda i: (0, 0)),
          pl.BlockSpec((49, hw), lambda i: (0, 0)),
      ],
      out_specs=pl.BlockSpec((1, 49, c_feat), lambda i: (i, 0, 0)),
      compiler_params=pltpu.CompilerParams(
          dimension_semantics=("parallel",)),
  )(patches, w_conv, params["b_conv"], pool_mat)

  # ---- kernel 2: classifier MLP + 9 packed heads (K-tiled first Linear) ----
  feat_dim = 49 * c_feat
  flat = pooled.reshape(n, 1, feat_dim)                          # lane-dense flatten
  tk = _pick_k_tile(feat_dim)
  kt = feat_dim // tk

  heads = pl.pallas_call(
      _classifier_heads_kernel,
      out_shape=jax.ShapeDtypeStruct((n, 1, n_heads_out), jnp.float32),
      grid=(n, kt),
      in_specs=[
          pl.BlockSpec((1, 1, tk), lambda i, k: (i, 0, k)),
          pl.BlockSpec((tk, hidden), lambda i, k: (k, 0)),
          pl.BlockSpec((1, hidden), lambda i, k: (0, 0)),
          pl.BlockSpec((hidden, hidden), lambda i, k: (0, 0)),
          pl.BlockSpec((1, hidden), lambda i, k: (0, 0)),
          pl.BlockSpec((hidden, last_channel), lambda i, k: (0, 0)),
          pl.BlockSpec((1, last_channel), lambda i, k: (0, 0)),
          pl.BlockSpec((last_channel, n_heads_out), lambda i, k: (0, 0)),
          pl.BlockSpec((1, n_heads_out), lambda i, k: (0, 0)),
      ],
      out_specs=pl.BlockSpec((1, 1, n_heads_out), lambda i, k: (i, 0, 0)),
      scratch_shapes=[pltpu.VMEM((1, hidden), jnp.float32)],
      compiler_params=pltpu.CompilerParams(
          dimension_semantics=("parallel", "arbitrary")),
  )(flat, params["w1"], params["b1"], params["w2"], params["b2"],
    params["w3"], params["b3"], params["wh"], params["bh"])

  y = heads.reshape(n, n_heads_out)
  return tuple(y[:, i * num_classes:(i + 1) * num_classes] for i in range(9))


# ---------------------------------------------------------------------------
# Params + pure-JAX reference
# ---------------------------------------------------------------------------
def init_params(key, *, cin, c_feat, hidden, last_channel, num_classes):
  """Deterministic random parameters.

  (The PyTorch module initializes Linear weights N(0, 0.01) and biases 0; here
  fan-in-scaled weights and small random biases keep activations O(1) so the
  bias/ReLU paths are actually exercised by the numerical check.)
  """
  ks = jax.random.split(key, 10)

  def w(k, shape, fan_in):
    return jnp.sqrt(2.0 / fan_in) * jax.random.normal(k, shape, jnp.float32)

  def b(k, width):
    return 0.05 * jax.random.normal(k, (1, width), jnp.float32)

  feat_dim = 7 * 7 * c_feat
  head_keys = jax.random.split(ks[8], 9)
  return dict(
      w_conv=w(ks[0], (3, 3, cin, c_feat), 9 * cin),
      b_conv=b(ks[1], c_feat),
      w1=w(ks[2], (feat_dim, hidden), feat_dim),
      b1=b(ks[3], hidden),
      w2=w(ks[4], (hidden, hidden), hidden),
      b2=b(ks[5], hidden),
      w3=w(ks[6], (hidden, last_channel), hidden),
      b3=b(ks[7], last_channel),
      wh=jnp.concatenate(
          [w(hk, (last_channel, num_classes), last_channel)
           for hk in head_keys], axis=1),
      bh=b(ks[9], 9 * num_classes),
  )


def vgg_ref(x_nchw, params, *, num_classes=66):
  """Pure-JAX/XLA reference (inference mode) for correctness checking."""
  x = jnp.transpose(x_nchw, (0, 2, 3, 1))                        # NHWC
  h = lax.conv_general_dilated(
      x, params["w_conv"], (1, 1), ((1, 1), (1, 1)),
      dimension_numbers=("NHWC", "HWIO", "NHWC"))
  h = jnp.maximum(h + params["b_conv"], 0.0)
  n, hh, ww, c = h.shape
  assert hh % 7 == 0 and ww % 7 == 0                              # test shapes
  pooled = h.reshape(n, 7, hh // 7, 7, ww // 7, c).mean(axis=(2, 4))
  flat = pooled.reshape(n, 7 * 7 * c)
  h1 = jnp.maximum(flat @ params["w1"] + params["b1"], 0.0)
  h2 = jnp.maximum(h1 @ params["w2"] + params["b2"], 0.0)
  feat = h2 @ params["w3"] + params["b3"]
  y = feat @ params["wh"] + params["bh"]
  return tuple(y[:, i * num_classes:(i + 1) * num_classes] for i in range(9))


# ---------------------------------------------------------------------------
if __name__ == "__main__":
  # Small shapes consistent with the module structure: batch=2, channels=4,
  # spatial=14 (so AdaptiveAvgPool2d((7,7)) does a real 2x2 pool).  128/256/128
  # stand in for VGG's 512 feature channels / 4096 hidden / 1000 last_channel.
  N, CIN, H, W = 2, 4, 14, 14
  C_FEAT, HIDDEN, LAST_CHANNEL, NUM_CLASSES = 128, 256, 128, 66

  key = jax.random.PRNGKey(0)
  kx, kp = jax.random.split(key)
  x = jax.random.normal(kx, (N, CIN, H, W), jnp.float32)          # NCHW input
  params = init_params(kp, cin=CIN, c_feat=C_FEAT, hidden=HIDDEN,
                       last_channel=LAST_CHANNEL, num_classes=NUM_CLASSES)

  outs = vgg_forward_pallas(x, params, num_classes=NUM_CLASSES)
  outs = jax.block_until_ready(outs)

  refs = vgg_ref(x, params, num_classes=NUM_CLASSES)
  assert len(outs) == 9
  max_err = 0.0
  for o, r in zip(outs, refs):
    assert o.shape == (N, NUM_CLASSES), o.shape
    max_err = max(max_err, float(jnp.max(jnp.abs(o - r))))
  # Tolerance accounts for f32-via-bf16 MXU passes differing between the XLA
  # reference (exact-f32 mean-pool / conv) and the kernel's matmul formulation;
  # structural bugs would produce O(1) errors.
  assert max_err < 5e-2, f"max_err={max_err}"
  print("KERNEL_OK")
</pallas_src>

<mosaic_0001>
module attributes {stable_mosaic.version = 11 : i64} {
  func.func @_features_avgpool_kernel(%arg0: i32, %arg1: memref<1x196x36xf32, #tpu.memory_space<vmem>>, %arg2: memref<36x128xf32, #tpu.memory_space<vmem>>, %arg3: memref<1x128xf32, #tpu.memory_space<vmem>>, %arg4: memref<49x196xf32, #tpu.memory_space<vmem>>, %arg5: memref<1x49x128xf32, #tpu.memory_space<vmem>>) attributes {dimension_semantics = [#tpu.dimension_semantics<parallel>], iteration_bounds = array<i64: 2>, scalar_prefetch = 0 : i64, scratch_operands = 0 : i64, tpu.core_type = #tpu.core_type<tc>, window_params = [{transform_indices = @transform_0, window_bounds = array<i64: 1, 196, 36>}, {pipeline_mode = #tpu.pipeline_mode<synchronous>, transform_indices = @transform_1, window_bounds = array<i64: 36, 128>}, {pipeline_mode = #tpu.pipeline_mode<synchronous>, transform_indices = @transform_2, window_bounds = array<i64: 1, 128>}, {pipeline_mode = #tpu.pipeline_mode<synchronous>, transform_indices = @transform_3, window_bounds = array<i64: 49, 196>}, {transform_indices = @transform_4, window_bounds = array<i64: 1, 49, 128>}]} {
    %c0 = arith.constant 0 : index
    %c0_0 = arith.constant 0 : index
    %c0_1 = arith.constant 0 : index
    %0 = vector.load %arg1[%c0, %c0_0, %c0_1] : memref<1x196x36xf32, #tpu.memory_space<vmem>>, vector<1x196x36xf32>
    %1 = vector.shape_cast %0 : vector<1x196x36xf32> to vector<196x36xf32>
    %c0_2 = arith.constant 0 : index
    %c0_3 = arith.constant 0 : index
    %2 = vector.load %arg2[%c0_2, %c0_3] : memref<36x128xf32, #tpu.memory_space<vmem>>, vector<36x128xf32>
    %cst = arith.constant dense<0.000000e+00> : vector<196x128xf32>
    %3 = tpu.matmul %1, %2, %cst {dimension_numbers = #tpu.dot_dimension_numbers<[1], [0], [0], [1], [0, 0, 1, 1], [], []>} : vector<196x36xf32>, vector<36x128xf32>, vector<196x128xf32> -> vector<196x128xf32>
    %c0_4 = arith.constant 0 : index
    %c0_5 = arith.constant 0 : index
    %4 = vector.load %arg3[%c0_4, %c0_5] : memref<1x128xf32, #tpu.memory_space<vmem>>, vector<1x128xf32>
    %5 = vector.broadcast %4 : vector<1x128xf32> to vector<196x128xf32>
    %6 = arith.addf %3, %5 : vector<196x128xf32>
    %cst_6 = arith.constant 0.000000e+00 : f32
    %7 = vector.broadcast %cst_6 : f32 to vector<196x128xf32>
    %8 = arith.maximumf %6, %7 : vector<196x128xf32>
    %c0_7 = arith.constant 0 : index
    %c0_8 = arith.constant 0 : index
    %9 = vector.load %arg4[%c0_7, %c0_8] : memref<49x196xf32, #tpu.memory_space<vmem>>, vector<49x196xf32>
    %cst_9 = arith.constant dense<0.000000e+00> : vector<49x128xf32>
    %10 = tpu.matmul %9, %8, %cst_9 {dimension_numbers = #tpu.dot_dimension_numbers<[1], [0], [0], [1], [0, 0, 1, 1], [], []>} : vector<49x196xf32>, vector<196x128xf32>, vector<49x128xf32> -> vector<49x128xf32>
    %c0_10 = arith.constant 0 : index
    %c0_11 = arith.constant 0 : index
    %c0_12 = arith.constant 0 : index
    %11 = vector.load %arg5[%c0_10, %c0_11, %c0_12] : memref<1x49x128xf32, #tpu.memory_space<vmem>>, vector<1x49x128xf32>
    %12 = vector.shape_cast %11 : vector<1x49x128xf32> to vector<49x128xf32>
    %13 = vector.shape_cast %10 : vector<49x128xf32> to vector<1x49x128xf32>
    tpu.vector_store %arg5[%c0_10, %c0_11, %c0_12], %13 {strides = array<i32>} : memref<1x49x128xf32, #tpu.memory_space<vmem>>, vector<1x49x128xf32>,
    return
  }
  func.func @transform_0(%arg0: i32) -> (i32, i32, i32) {
    %c0_i32 = arith.constant 0 : i32
    %c0_i32_0 = arith.constant 0 : i32
    %c0_i32_1 = arith.constant 0 : i32
    return %arg0, %c0_i32, %c0_i32_0 : i32, i32, i32
  }
  func.func @transform_1(%arg0: i32) -> (i32, i32) {
    %c0_i32 = arith.constant 0 : i32
    %c0_i32_0 = arith.constant 0 : i32
    %c0_i32_1 = arith.constant 0 : i32
    return %c0_i32, %c0_i32_0 : i32, i32
  }
  func.func @transform_2(%arg0: i32) -> (i32, i32) {
    %c0_i32 = arith.constant 0 : i32
    %c0_i32_0 = arith.constant 0 : i32
    %c0_i32_1 = arith.constant 0 : i32
    return %c0_i32, %c0_i32_0 : i32, i32
  }
  func.func @transform_3(%arg0: i32) -> (i32, i32) {
    %c0_i32 = arith.constant 0 : i32
    %c0_i32_0 = arith.constant 0 : i32
    %c0_i32_1 = arith.constant 0 : i32
    return %c0_i32, %c0_i32_0 : i32, i32
  }
  func.func @transform_4(%arg0: i32) -> (i32, i32, i32) {
    %c0_i32 = arith.constant 0 : i32
    %c0_i32_0 = arith.constant 0 : i32
    %c0_i32_1 = arith.constant 0 : i32
    return %arg0, %c0_i32, %c0_i32_0 : i32, i32, i32
  }
}

</mosaic_0001>

<llo_original>
// kernel: tpu_custom_call.1
$region0: #{tpu_custom_call.1}
  #allocation0 [shape = 'u32[]', space=smem, size = 0x4, offset = 0x4, fixed_abs, tag = 'smem constant byte address 0x4 - core index']
  #allocation1 [shape = 'u32[144,128]{1,0:T(1,128)}', space=vmem, size = 0x12000, scoped, tag = 'internal scratch']
  %s0 = inlined_call_operand.vmem [shape: f32[2,196,36], index: 0, kind: input, shape index: {}]
  %s1 = inlined_call_operand.vmem [shape: f32[36,128], index: 1, kind: input, shape index: {}]
  %s2 = inlined_call_operand.vmem [shape: f32[1,128], index: 2, kind: input, shape index: {}]
  %s3 = inlined_call_operand.vmem [shape: f32[49,196], index: 3, kind: input, shape index: {}]
  %s4 = inlined_call_operand.vmem [shape: f32[2,49,128], index: 4, kind: output, shape index: {}]
  %s5 = sld [smem:[#allocation0]]
  $region49: #{tpu_custom_call.1} parent=0
    _
  %s7 = ssub.s32 1, %s5
  %s8 = scalar_select 0, %s7, %s5
  loop: start=0, step=1, limit=4
  $region2: #{tpu_custom_call.1} parent=0 // loop_pre_header
    _
  $region3: #{tpu_custom_call.1} parent=0 // loop_header
    %s10 = sphi 0, %s14
    %p11 = scmp.ge.s32.totalorder %s10, 4
    %s20 = sphi 0, %s22
    %s23 = sphi 0, %s20
    %s24 = sphi 0, %s23
    %s40 = sphi 0, %s24
    %s44 = sphi 0, %s44
    %s46 = sphi 0, %s44
    %s47 = sphi 0, %s46
    %s61 = sphi 0, %s47
    %s65 = sphi 0, %s65
    %s67 = sphi 0, %s65
    %s68 = sphi 0, %s67
    %s82 = sphi 0, %s68
    %s86 = sphi 0, %s86
    %s88 = sphi 0, %s86
    %s89 = sphi 0, %s88
    %s103 = sphi 0, %s89
    %s109 = sphi 0, %s111
    %s112 = sphi 0, %s109
    %s113 = sphi 0, %s112
    %s129 = sphi 0, %s113
  $region4: #{tpu_custom_call.1} parent=0 // loop_header_branch
    %13 = sbr.rel (%p11) target = $region8
  $region5: #{tpu_custom_call.1} parent=0 // loop_body
    %s15 = ssub.s32 %s10, 1
    %s16 = ssub.s32 %s10, 2
    %s17 = sadd.s32 %s10, 1
    %s18 = ssub.s32 %s10, %s17
    %p19 = scmp.eq.s32.totalorder %s18, 0
    %s21 = sadd.s32 %s20, 1
    %s22 = scalar_select %p19, %s20, %s21
    %p25 = pneg %p19
    %p26 = scmp.eq.s32.totalorder %s10, 1
    %p27 = por %p25, %p26
    %p28 = scmp.ne.s32.totalorder %s20, %s23
    %p29 = scmp.eq.s32.totalorder %s10, 0
    %p30 = por %p28, %p29
    %p31 = scmp.ne.s32.totalorder %s20, %s23
    %p32 = scmp.eq.s32.totalorder %s15, 1
    %p33 = por %p31, %p32
    %p34 = scmp.ne.s32.totalorder %s23, %s24
    %p35 = scmp.eq.s32.totalorder %s15, 0
    %p36 = por %p34, %p35
    %p37 = scmp.ne.s32.totalorder %s23, %s24
    %p38 = scmp.eq.s32.totalorder %s16, 1
    %p39 = por %p37, %p38
    %p41 = scmp.ne.s32.totalorder %s24, %s40
    %p42 = scmp.eq.s32.totalorder %s16, 0
    %p43 = por %p41, %p42
    %s45 = sadd.s32 %s44, 1
    %p48 = scmp.eq.s32.totalorder %s10, 1
    %p49 = scmp.ne.s32.totalorder %s44, %s46
    %p50 = scmp.eq.s32.totalorder %s10, 0
    %p51 = por %p49, %p50
    %p52 = scmp.ne.s32.totalorder %s44, %s46
    %p53 = scmp.eq.s32.totalorder %s15, 1
    %p54 = por %p52, %p53
    %p55 = scmp.ne.s32.totalorder %s46, %s47
    %p56 = scmp.eq.s32.totalorder %s15, 0
    %p57 = por %p55, %p56
    %p58 = scmp.ne.s32.totalorder %s46, %s47
    %p59 = scmp.eq.s32.totalorder %s16, 1
    %p60 = por %p58, %p59
    %p62 = scmp.ne.s32.totalorder %s47, %s61
    %p63 = scmp.eq.s32.totalorder %s16, 0
    %p64 = por %p62, %p63
    %s66 = sadd.s32 %s65, 1
    %p69 = scmp.eq.s32.totalorder %s10, 1
    %p70 = scmp.ne.s32.totalorder %s65, %s67
    %p71 = scmp.eq.s32.totalorder %s10, 0
    %p72 = por %p70, %p71
    %p73 = scmp.ne.s32.totalorder %s65, %s67
    %p74 = scmp.eq.s32.totalorder %s15, 1
    %p75 = por %p73, %p74
    %p76 = scmp.ne.s32.totalorder %s67, %s68
    %p77 = scmp.eq.s32.totalorder %s15, 0
    %p78 = por %p76, %p77
    %p79 = scmp.ne.s32.totalorder %s67, %s68
    %p80 = scmp.eq.s32.totalorder %s16, 1
    %p81 = por %p79, %p80
    %p83 = scmp.ne.s32.totalorder %s68, %s82
    %p84 = scmp.eq.s32.totalorder %s16, 0
    %p85 = por %p83, %p84
    %s87 = sadd.s32 %s86, 1
    %p90 = scmp.eq.s32.totalorder %s10, 1
    %p91 = scmp.ne.s32.totalorder %s86, %s88
    %p92 = scmp.eq.s32.totalorder %s10, 0
    %p93 = por %p91, %p92
    %p94 = scmp.ne.s32.totalorder %s86, %s88
    %p95 = scmp.eq.s32.totalorder %s15, 1
    %p96 = por %p94, %p95
    %p97 = scmp.ne.s32.totalorder %s88, %s89
    %p98 = scmp.eq.s32.totalorder %s15, 0
    %p99 = por %p97, %p98
    %p100 = scmp.ne.s32.totalorder %s88, %s89
    %p101 = scmp.eq.s32.totalorder %s16, 1
    %p102 = por %p100, %p101
    %p104 = scmp.ne.s32.totalorder %s89, %s103
    %p105 = scmp.eq.s32.totalorder %s16, 0
    %p106 = por %p104, %p105
    %s107 = ssub.s32 %s10, %s17
    %p108 = scmp.eq.s32.totalorder %s107, 0
    %s110 = sadd.s32 %s109, 1
    %s111 = scalar_select %p108, %s109, %s110
    %p114 = pneg %p108
    %p115 = scmp.eq.s32.totalorder %s10, 1
    %p116 = por %p114, %p115
    %p117 = scmp.ne.s32.totalorder %s109, %s112
    %p118 = scmp.eq.s32.totalorder %s10, 0
    %p119 = por %p117, %p118
    %p120 = scmp.ne.s32.totalorder %s109, %s112
    %p121 = scmp.eq.s32.totalorder %s15, 1
    %p122 = por %p120, %p121
    %p123 = scmp.ne.s32.totalorder %s112, %s113
    %p124 = scmp.eq.s32.totalorder %s15, 0
    %p125 = por %p123, %p124
    %p126 = scmp.ne.s32.totalorder %s112, %s113
    %p127 = scmp.eq.s32.totalorder %s16, 1
    %p128 = por %p126, %p127
    %p130 = scmp.ne.s32.totalorder %s113, %s129
    %p131 = scmp.eq.s32.totalorder %s16, 0
    %p132 = por %p130, %p131
    %p133 = scmp.le.s32.totalorder 1, %s10
    %p134 = scmp.lt.s32.totalorder %s10, 3
    %p135 = pnand %p133, %p134
    %p136 = pneg %p135
    // Predicated region
    $region9: #{tpu_custom_call.1} parent=5 // pred_check
      _
    $region10: #{tpu_custom_call.1} parent=5 // pred_check_branch
      %138 = sbr.rel (%p135) target = $region12
    $region11: #{tpu_custom_call.1} parent=5 // pred_region
      %s139 = ssub.s32 %s10, 1
      // Predicated region
      $region13: #{tpu_custom_call.1} parent=11 // pred_check
        %p140 = pneg %p57
      $region14: #{tpu_custom_call.1} parent=11 // pred_check_branch
        %142 = sbr.rel (%p140) target = $region16
      $region15: #{tpu_custom_call.1} parent=11 // pred_region
        _
      $region16: #{tpu_custom_call.1} parent=11 // pred_fallthru
        _
      // Predicated region
      $region17: #{tpu_custom_call.1} parent=11 // pred_check
        %p143 = pneg %p78
      $region18: #{tpu_custom_call.1} parent=11 // pred_check_branch
        %145 = sbr.rel (%p143) target = $region20
      $region19: #{tpu_custom_call.1} parent=11 // pred_region
        _
      $region20: #{tpu_custom_call.1} parent=11 // pred_fallthru
        _
      // Predicated region
      $region21: #{tpu_custom_call.1} parent=11 // pred_check
        %p146 = pneg %p99
      $region22: #{tpu_custom_call.1} parent=11 // pred_check_branch
        %148 = sbr.rel (%p146) target = $region24
      $region23: #{tpu_custom_call.1} parent=11 // pred_region
        _
      $region24: #{tpu_custom_call.1} parent=11 // pred_fallthru
        _
    $region12: #{tpu_custom_call.1} parent=5 // pred_fallthru
      _
    %p149 = scmp.lt.s32.totalorder %s10, 2
    // Predicated region
    $region25: #{tpu_custom_call.1} parent=5 // pred_check
      %p150 = pneg %p149
    $region26: #{tpu_custom_call.1} parent=5 // pred_check_branch
      %152 = sbr.rel (%p150) target = $region28
    $region27: #{tpu_custom_call.1} parent=5 // pred_region
      // Predicated region
      $region29: #{tpu_custom_call.1} parent=27 // pred_check
        %p153 = pneg %p30
      $region30: #{tpu_custom_call.1} parent=27 // pred_check_branch
        %155 = sbr.rel (%p153) target = $region32
      $region31: #{tpu_custom_call.1} parent=27 // pred_region
        %p156 = scmp.lt.s32.totalorder %s10, 1
        %s157 = scalar_select %p156, %s10, 1
        %s158 = smul.addr %s157, 25
        %s159 = smul.addr %s158, 8
        %s160 = scalar_lea.vmem %s0, %s159
      $region32: #{tpu_custom_call.1} parent=27 // pred_fallthru
        _
    $region28: #{tpu_custom_call.1} parent=5 // pred_fallthru
      _
    %p161 = scmp.le.s32.totalorder 1, %s10
    %p162 = scmp.lt.s32.totalorder %s10, 3
    %p163 = pnand %p161, %p162
    %p164 = pneg %p163
    // Predicated region
    $region33: #{tpu_custom_call.1} parent=5 // pred_check
      _
    $region34: #{tpu_custom_call.1} parent=5 // pred_check_branch
      %166 = sbr.rel (%p163) target = $region36
    $region35: #{tpu_custom_call.1} parent=5 // pred_region
      %s167 = ssub.s32 %s10, 1
      %p168 = scmp.lt.s32.totalorder %s15, 1
      %s169 = scalar_select %p168, %s15, 1
      %s170 = smul.addr %s169, 25
      %s171 = smul.addr %s170, 8
      %s172 = scalar_lea.vmem %s0, %s171
      %p173 = pneg %p36
      %p174 = pneg %p33
      %p175 = pneg %p57
      %p176 = pneg %p54
      %p177 = pneg %p78
      %p178 = pneg %p75
      %p179 = pneg %p99
      %p180 = pneg %p96
      %p181 = pneg %p125
      %p182 = pneg %p122
      %p183 = scmp.lt.s32.totalorder %s15, 1
      %s184 = scalar_select %p183, %s15, 1
      %s185 = smul.addr %s184, 7
      %s186 = smul.addr %s185, 8
      %s187 = scalar_lea.vmem %s4, %s186
      %p188 = scmp.lt.s32.totalorder %s15, 1
      %s189 = scalar_select %p188, %s15, 1
      %s190 = smul.addr %s189, 25
      %s191 = smul.addr %s190, 8
      %s192 = scalar_lea.vmem %s0, %s191
      %p193 = scmp.lt.s32.totalorder %s15, 1
      %s194 = scalar_select %p193, %s15, 1
      %s195 = smul.addr %s194, 7
      %s196 = smul.addr %s195, 8
      %s197 = scalar_lea.vmem %s4, %s196
      %v198 = vld [vmem:[%s192] sm:$0xff]
      %v199 = vld [vmem:[%s192 + $0x8] sm:$0xff]
      %v200 = vld [vmem:[%s192 + $0x10] sm:$0xff]
      %v201 = vld [vmem:[%s192 + $0x18] sm:$0xff]
      %v202 = vld [vmem:[%s192 + $0x20] sm:$0xff]
      %v203 = vld [vmem:[%s192 + $0x28] sm:$0xff]
      %v204 = vld [vmem:[%s192 + $0x30] sm:$0xff]
      %v205 = vld [vmem:[%s192 + $0x38] sm:$0xff]
      %v206 = vld [vmem:[%s192 + $0x40] sm:$0xff]
      %v207 = vld [vmem:[%s192 + $0x48] sm:$0xff]
      %v208 = vld [vmem:[%s192 + $0x50] sm:$0xff]
      %v209 = vld [vmem:[%s192 + $0x58] sm:$0xff]
      %v210 = vld [vmem:[%s192 + $0x60] sm:$0xff]
      %v211 = vld [vmem:[%s192 + $0x68] sm:$0xff]
      %v212 = vld [vmem:[%s192 + $0x70] sm:$0xff]
      %v213 = vld [vmem:[%s192 + $0x78] sm:$0xff]
      %v214 = vld [vmem:[%s192 + $0x80] sm:$0xff]
      %v215 = vld [vmem:[%s192 + $0x88] sm:$0xff]
      %v216 = vld [vmem:[%s192 + $0x90] sm:$0xff]
      %v217 = vld [vmem:[%s192 + $0x98] sm:$0xff]
      %v218 = vld [vmem:[%s192 + $0xa0] sm:$0xff]
      %v219 = vld [vmem:[%s192 + $0xa8] sm:$0xff]
      %v220 = vld [vmem:[%s192 + $0xb0] sm:$0xff]
      %v221 = vld [vmem:[%s192 + $0xb8] sm:$0xff]
      %v222 = vld [vmem:[%s192 + $0xc0] sm:$0xf]
      %v223 = vld [vmem:[%s1] sm:$0xff]
      %v224 = vld [vmem:[%s1 + $0x8] sm:$0xff]
      %v225 = vld [vmem:[%s1 + $0x10] sm:$0xff]
      %v226 = vld [vmem:[%s1 + $0x18] sm:$0xff]
      %v227 = vld [vmem:[%s1 + $0x20] sm:$0xf]
      %v228 = vld [vmem:[%s2] sm:$0x1]
      %v230 = vlaneseq
      %v231 = vshrl.u32 %v230, 7
      %v232 = vsub.s32 0, %v231
      %v233 = vrot.slane %v228, %v232
      %vm235 = vcmask 293888
      %v237 = vsel %vm235, %v198, 0
      %v240 = vsel %vm235, %v199, 0
      %v243 = vsel %vm235, %v200, 0
      %v246 = vsel %vm235, %v201, 0
      %v249 = vsel %vm235, %v202, 0
      %v252 = vsel %vm235, %v203, 0
      %v255 = vsel %vm235, %v204, 0
      %v258 = vsel %vm235, %v205, 0
      %v261 = vsel %vm235, %v206, 0
      %v264 = vsel %vm235, %v207, 0
      %v267 = vsel %vm235, %v208, 0
      %v270 = vsel %vm235, %v209, 0
      %v273 = vsel %vm235, %v210, 0
      %v276 = vsel %vm235, %v211, 0
      %v279 = vsel %vm235, %v212, 0
      %v282 = vsel %vm235, %v213, 0
      %v285 = vsel %vm235, %v214, 0
      %v288 = vsel %vm235, %v215, 0
      %v291 = vsel %vm235, %v216, 0
      %v294 = vsel %vm235, %v217, 0
      %v297 = vsel %vm235, %v218, 0
      %v300 = vsel %vm235, %v219, 0
      %v303 = vsel %vm235, %v220, 0
      %v306 = vsel %vm235, %v221, 0
      %v309 = vsel %vm235, %v222, 0
      %vm311 = vcmask 1043456
      %v313 = vsel %vm311, %v227, 0
      %315 = vmatprep.subr.mxu0 0.0
      %316 = vmatpush1.msra.mxu0 %v223
      %317 = vmatprep.subr.mxu0 0.0
      %318 = vmatpush1.msra.mxu0 %v224
      %319 = vmatprep.subr.mxu0 0.0
      %320 = vmatpush1.msra.mxu0 %v225
      %321 = vmatprep.subr.mxu0 0.0
      %322 = vmatpush1.msra.mxu0 %v226
      %323 = vmatprep.subr.mxu0 0.0
      %324 = vmatpush1.msra.mxu0 %v313
      %325 = vmatprep.subr.mxu0 0.0
      %326 = vmatpush1.msra.mxu0 0.0
      %327 = vmatprep.subr.mxu0 0.0
      %328 = vmatpush1.msra.mxu0 0.0
      %329 = vmatprep.subr.mxu0 0.0
      %330 = vmatpush1.msra.mxu0 0.0
      %331 = vmatprep.subr.mxu0 0.0
      %332 = vmatpush1.msra.mxu0 0.0
      %333 = vmatprep.subr.mxu0 0.0
      %334 = vmatpush1.msra.mxu0 0.0
      %335 = vmatprep.subr.mxu0 0.0
      %336 = vmatpush1.msra.mxu0 0.0
      %337 = vmatprep.subr.mxu0 0.0
      %338 = vmatpush1.msra.mxu0 0.0
      %339 = vmatprep.subr.mxu0 0.0
      %340 = vmatpush1.msra.mxu0 0.0
      %341 = vmatprep.subr.mxu0 0.0
      %342 = vmatpush1.msra.mxu0 0.0
      %343 = vmatprep.subr.mxu0 0.0
      %344 = vmatpush1.msra.mxu0 0.0
      %345 = vmatprep.subr.mxu0 0.0
      %346 = vmatpush1.msra.mxu0 0.0
      %347 = vmatprep.subr.mxu0 0.0
      %348 = vmatpush1.msra.mxu0 0.0
      %349 = vmatprep.subr.mxu0 0.0
      %350 = vmatpush1.msra.mxu0 0.0
      %351 = vmatprep.subr.mxu0 0.0
      %352 = vmatpush1.msra.mxu0 0.0
      %353 = vmatprep.subr.mxu0 0.0
      %354 = vmatpush1.msra.mxu0 0.0
      %355 = vmatprep.subr.mxu0 0.0
      %356 = vmatpush1.msra.mxu0 0.0
      %357 = vmatprep.subr.mxu0 0.0
      %358 = vmatpush1.msra.mxu0 0.0
      %359 = vmatprep.subr.mxu0 0.0
      %360 = vmatpush1.msra.mxu0 0.0
      %361 = vmatprep.subr.mxu0 0.0
      %362 = vmatpush1.msra.mxu0 0.0
      %363 = vmatprep.subr.mxu0 0.0
      %364 = vmatpush1.msra.mxu0 0.0
      %365 = vmatprep.subr.mxu0 0.0
      %366 = vmatpush1.msra.mxu0 0.0
      %367 = vmatprep.subr.mxu0 0.0
      %368 = vmatpush1.msra.mxu0 0.0
      %369 = vmatprep.subr.mxu0 0.0
      %370 = vmatpush1.msra.mxu0 0.0
      %371 = vmatprep.subr.mxu0 0.0
      %372 = vmatpush1.msra.mxu0 0.0
      %373 = vmatprep.subr.mxu0 0.0
      %374 = vmatpush1.msra.mxu0 0.0
      %375 = vmatprep.subr.mxu0 0.0
      %376 = vmatpush1.msra.mxu0 0.0
      %377 = vmatprep.subr.mxu0 0.0
      %378 = vmatpush1.msra.mxu0 0.0
      %379 = vmatprep.mubr.f32.mxu0 0.0
      %380 = vmatmul.mubr.f32.gmra.mrb[0].mxu0 %v237
      %v381 = vpop.f32.mrb[0].mxu0
      %v382 = vadd.f32 %v233, %v381
      %v383 = vpop.f32.mrb[0].mxu0
      %384 = vmatprep.mubr.f32.mxu0 0.0
      %385 = vmatmul.mubr.f32.gmra.mrb[0].mxu0 %v240
      %v386 = vpop.f32.mrb[0].mxu0
      %v387 = vadd.f32 %v233, %v386
      %v388 = vpop.f32.mrb[0].mxu0
      %389 = vmatprep.mubr.f32.mxu0 0.0
      %390 = vmatmul.mubr.f32.gmra.mrb[0].mxu0 %v243
      %v391 = vpop.f32.mrb[0].mxu0
      %v392 = vadd.f32 %v233, %v391
      %v393 = vpop.f32.mrb[0].mxu0
      %394 = vmatprep.mubr.f32.mxu0 0.0
      %395 = vmatmul.mubr.f32.gmra.mrb[0].mxu0 %v246
      %v396 = vpop.f32.mrb[0].mxu0
      %v397 = vadd.f32 %v233, %v396
      %v398 = vpop.f32.mrb[0].mxu0
      %399 = vmatprep.mubr.f32.mxu0 0.0
      %400 = vmatmul.mubr.f32.gmra.mrb[0].mxu0 %v249
      %v401 = vpop.f32.mrb[0].mxu0
      %v402 = vadd.f32 %v233, %v401
      %v403 = vpop.f32.mrb[0].mxu0
      %404 = vmatprep.mubr.f32.mxu0 0.0
      %405 = vmatmul.mubr.f32.gmra.mrb[0].mxu0 %v252
      %v406 = vpop.f32.mrb[0].mxu0
      %v407 = vadd.f32 %v233, %v406
      %v408 = vpop.f32.mrb[0].mxu0
      %409 = vmatprep.mubr.f32.mxu0 0.0
      %410 = vmatmul.mubr.f32.gmra.mrb[0].mxu0 %v255
      %v411 = vpop.f32.mrb[0].mxu0
      %v412 = vadd.f32 %v233, %v411
      %v413 = vpop.f32.mrb[0].mxu0
      %414 = vmatprep.mubr.f32.mxu0 0.0
      %415 = vmatmul.mubr.f32.gmra.mrb[0].mxu0 %v258
      %v416 = vpop.f32.mrb[0].mxu0
      %v417 = vadd.f32 %v233, %v416
      %v418 = vpop.f32.mrb[0].mxu0
      %419 = vmatprep.mubr.f32.mxu0 0.0
      %420 = vmatmul.mubr.f32.gmra.mrb[0].mxu0 %v261
      %v421 = vpop.f32.mrb[0].mxu0
      %v422 = vadd.f32 %v233, %v421
      %v423 = vpop.f32.mrb[0].mxu0
      %424 = vmatprep.mubr.f32.mxu0 0.0
      %425 = vmatmul.mubr.f32.gmra.mrb[0].mxu0 %v264
      %v426 = vpop.f32.mrb[0].mxu0
      %v427 = vadd.f32 %v233, %v426
      %v428 = vpop.f32.mrb[0].mxu0
      %429 = vmatprep.mubr.f32.mxu0 0.0
      %430 = vmatmul.mubr.f32.gmra.mrb[0].mxu0 %v267
      %v431 = vpop.f32.mrb[0].mxu0
      %v432 = vadd.f32 %v233, %v431
      %v433 = vpop.f32.mrb[0].mxu0
      %434 = vmatprep.mubr.f32.mxu0 0.0
      %435 = vmatmul.mubr.f32.gmra.mrb[0].mxu0 %v270
      %v436 = vpop.f32.mrb[0].mxu0
      %v437 = vadd.f32 %v233, %v436
      %v438 = vpop.f32.mrb[0].mxu0
      %439 = vmatprep.mubr.f32.mxu0 0.0
      %440 = vmatmul.mubr.f32.gmra.mrb[0].mxu0 %v273
      %v441 = vpop.f32.mrb[0].mxu0
      %v442 = vadd.f32 %v233, %v441
      %v443 = vpop.f32.mrb[0].mxu0
      %444 = vmatprep.mubr.f32.mxu0 0.0
      %445 = vmatmul.mubr.f32.gmra.mrb[0].mxu0 %v276
      %v446 = vpop.f32.mrb[0].mxu0
      %v447 = vadd.f32 %v233, %v446
      %v448 = vpop.f32.mrb[0].mxu0
      %449 = vmatprep.mubr.f32.mxu0 0.0
      %450 = vmatmul.mubr.f32.gmra.mrb[0].mxu0 %v279
      %v451 = vpop.f32.mrb[0].mxu0
      %v452 = vadd.f32 %v233, %v451
      %v453 = vpop.f32.mrb[0].mxu0
      %454 = vmatprep.mubr.f32.mxu0 0.0
      %455 = vmatmul.mubr.f32.gmra.mrb[0].mxu0 %v282
      %v456 = vpop.f32.mrb[0].mxu0
      %v457 = vadd.f32 %v233, %v456
      %v458 = vpop.f32.mrb[0].mxu0
      %459 = vmatprep.mubr.f32.mxu0 0.0
      %460 = vmatmul.mubr.f32.gmra.mrb[0].mxu0 %v285
      %v461 = vpop.f32.mrb[0].mxu0
      %v462 = vadd.f32 %v233, %v461
      %v463 = vpop.f32.mrb[0].mxu0
      %464 = vmatprep.mubr.f32.mxu0 0.0
      %465 = vmatmul.mubr.f32.gmra.mrb[0].mxu0 %v288
      %v466 = vpop.f32.mrb[0].mxu0
      %v467 = vadd.f32 %v233, %v466
      %v468 = vpop.f32.mrb[0].mxu0
      %469 = vmatprep.mubr.f32.mxu0 0.0
      %470 = vmatmul.mubr.f32.gmra.mrb[0].mxu0 %v291
      %v471 = vpop.f32.mrb[0].mxu0
      %v472 = vadd.f32 %v233, %v471
      %v473 = vpop.f32.mrb[0].mxu0
      %474 = vmatprep.mubr.f32.mxu0 0.0
      %475 = vmatmul.mubr.f32.gmra.mrb[0].mxu0 %v294
      %v476 = vpop.f32.mrb[0].mxu0
      %v477 = vadd.f32 %v233, %v476
      %v478 = vpop.f32.mrb[0].mxu0
      %479 = vmatprep.mubr.f32.mxu0 0.0
      %480 = vmatmul.mubr.f32.gmra.mrb[0].mxu0 %v297
      %v481 = vpop.f32.mrb[0].mxu0
      %v482 = vadd.f32 %v233, %v481
      %v483 = vpop.f32.mrb[0].mxu0
      %484 = vmatprep.mubr.f32.mxu0 0.0
      %485 = vmatmul.mubr.f32.gmra.mrb[0].mxu0 %v300
      %v486 = vpop.f32.mrb[0].mxu0
      %v487 = vadd.f32 %v233, %v486
      %v488 = vpop.f32.mrb[0].mxu0
      %489 = vmatprep.mubr.f32.mxu0 0.0
      %490 = vmatmul.mubr.f32.gmra.mrb[0].mxu0 %v303
      %v491 = vpop.f32.mrb[0].mxu0
      %v492 = vadd.f32 %v233, %v491
      %v493 = vpop.f32.mrb[0].mxu0
      %494 = vmatprep.mubr.f32.mxu0 0.0
      %495 = vmatmul.mubr.f32.gmra.mrb[0].mxu0 %v306
      %v496 = vpop.f32.mrb[0].mxu0
      %v497 = vadd.f32 %v233, %v496
      %v498 = vpop.f32.mrb[0].mxu0
      %499 = vmatprep.mubr.f32.mxu0 0.0
      %500 = vmatmul.mubr.f32.gmra.mrb[0].mxu0 %v309
      %v501 = vpop.f32.mrb[0].mxu0
      %v502 = vadd.f32 %v233, %v501
      %v503 = vpop.f32.mrb[0].mxu0
      %504 = vdwg.mxu0
      %v505 = vmax.f32 %v382, 0.0
      %v506 = vmax.f32 %v387, 0.0
      %v507 = vmax.f32 %v392, 0.0
      %v508 = vmax.f32 %v397, 0.0
      %v509 = vmax.f32 %v402, 0.0
      %v510 = vmax.f32 %v407, 0.0
      %v511 = vmax.f32 %v412, 0.0
      %v512 = vmax.f32 %v417, 0.0
      %v513 = vmax.f32 %v422, 0.0
      %v514 = vmax.f32 %v427, 0.0
      %v515 = vmax.f32 %v432, 0.0
      %v516 = vmax.f32 %v437, 0.0
      %v517 = vmax.f32 %v442, 0.0
      %v518 = vmax.f32 %v447, 0.0
      %v519 = vmax.f32 %v452, 0.0
      %v520 = vmax.f32 %v457, 0.0
      %v521 = vmax.f32 %v462, 0.0
      %v522 = vmax.f32 %v467, 0.0
      %v523 = vmax.f32 %v472, 0.0
      %v524 = vmax.f32 %v477, 0.0
      %v525 = vmax.f32 %v482, 0.0
      %v526 = vmax.f32 %v487, 0.0
      %v527 = vmax.f32 %v492, 0.0
      %v528 = vmax.f32 %v497, 0.0
      %v529 = vmax.f32 %v502, 0.0
      %v530 = vld [vmem:[%s3] sm:$0xff]
      %v531 = vld [vmem:[%s3 + $0x8] sm:$0xff]
      %v532 = vld [vmem:[%s3 + $0x10] sm:$0xff]
      %v533 = vld [vmem:[%s3 + $0x18] sm:$0xff]
      %v534 = vld [vmem:[%s3 + $0x20] sm:$0xff]
      %v535 = vld [vmem:[%s3 + $0x28] sm:$0xff]
      %v536 = vld [vmem:[%s3 + $0x30] sm:$0xff]
      %v537 = vld [vmem:[%s3 + $0x38] sm:$0xff]
      %v538 = vld [vmem:[%s3 + $0x40] sm:$0xff]
      %v539 = vld [vmem:[%s3 + $0x48] sm:$0xff]
      %v540 = vld [vmem:[%s3 + $0x50] sm:$0xff]
      %v541 = vld [vmem:[%s3 + $0x58] sm:$0xff]
      %v542 = vld [vmem:[%s3 + $0x60] sm:$0x1]
      %v543 = vld [vmem:[%s3 + $0x68] sm:$0x1]
      %vm544 = vcmask 556032
      %v546 = vsel %vm544, %v531, 0
      %v549 = vsel %vm544, %v533, 0
      %v552 = vsel %vm544, %v535, 0
      %v555 = vsel %vm544, %v537, 0
      %v558 = vsel %vm544, %v539, 0
      %v561 = vsel %vm544, %v541, 0
      %v564 = vsel %vm544, %v543, 0
      %v567 = vsel %vm311, %v529, 0
      %569 = vmatprep.subr.mxu0 0.0
      %570 = vmatpush1.msra.mxu0 %v505
      %571 = vmatprep.subr.mxu0 0.0
      %572 = vmatpush1.msra.mxu0 %v506
      %573 = vmatprep.subr.mxu0 0.0
      %574 = vmatpush1.msra.mxu0 %v507
      %575 = vmatprep.subr.mxu0 0.0
      %576 = vmatpush1.msra.mxu0 %v508
      %577 = vmatprep.subr.mxu0 0.0
      %578 = vmatpush1.msra.mxu0 %v509
      %579 = vmatprep.subr.mxu0 0.0
      %580 = vmatpush1.msra.mxu0 %v510
      %581 = vmatprep.subr.mxu0 0.0
      %582 = vmatpush1.msra.mxu0 %v511
      %583 = vmatprep.subr.mxu0 0.0
      %584 = vmatpush1.msra.mxu0 %v512
      %585 = vmatprep.subr.mxu0 0.0
      %586 = vmatpush1.msra.mxu0 %v513
      %587 = vmatprep.subr.mxu0 0.0
      %588 = vmatpush1.msra.mxu0 %v514
      %589 = vmatprep.subr.mxu0 0.0
      %590 = vmatpush1.msra.mxu0 %v515
      %591 = vmatprep.subr.mxu0 0.0
      %592 = vmatpush1.msra.mxu0 %v516
      %593 = vmatprep.subr.mxu0 0.0
      %594 = vmatpush1.msra.mxu0 %v517
      %595 = vmatprep.subr.mxu0 0.0
      %596 = vmatpush1.msra.mxu0 %v518
      %597 = vmatprep.subr.mxu0 0.0
      %598 = vmatpush1.msra.mxu0 %v519
      %599 = vmatprep.subr.mxu0 0.0
      %600 = vmatpush1.msra.mxu0 %v520
      %601 = vmatprep.subr.mxu0 0.0
      %602 = vmatpush1.msra.mxu0 %v521
      %603 = vmatprep.subr.mxu0 0.0
      %604 = vmatpush1.msra.mxu0 %v522
      %605 = vmatprep.subr.mxu0 0.0
      %606 = vmatpush1.msra.mxu0 %v523
      %607 = vmatprep.subr.mxu0 0.0
      %608 = vmatpush1.msra.mxu0 %v524
      %609 = vmatprep.subr.mxu0 0.0
      %610 = vmatpush1.msra.mxu0 %v525
      %611 = vmatprep.subr.mxu0 0.0
      %612 = vmatpush1.msra.mxu0 %v526
      %613 = vmatprep.subr.mxu0 0.0
      %614 = vmatpush1.msra.mxu0 %v527
      %615 = vmatprep.subr.mxu0 0.0
      %616 = vmatpush1.msra.mxu0 %v528
      %617 = vmatprep.subr.mxu0 0.0
      %618 = vmatpush1.msra.mxu0 %v567
      %619 = vmatprep.subr.mxu0 0.0
      %620 = vmatpush1.msra.mxu0 0.0
      %621 = vmatprep.subr.mxu0 0.0
      %622 = vmatpush1.msra.mxu0 0.0
      %623 = vmatprep.subr.mxu0 0.0
      %624 = vmatpush1.msra.mxu0 0.0
      %625 = vmatprep.subr.mxu0 0.0
      %626 = vmatpush1.msra.mxu0 0.0
      %627 = vmatprep.subr.mxu0 0.0
      %628 = vmatpush1.msra.mxu0 0.0
      %629 = vmatprep.subr.mxu0 0.0
      %630 = vmatpush1.msra.mxu0 0.0
      %631 = vmatprep.subr.mxu0 0.0
      %632 = vmatpush1.msra.mxu0 0.0
      %633 = vmatprep.mubr.f32.mxu0 %v546
      %634 = vmatmul.mubr.f32.gmra.mrb[0].mxu0 %v530
      %v635 = vpop.f32.mrb[0].mxu0
      %v636 = vadd.f32 0.0, %v635
      %v637 = vpop.f32.mrb[0].mxu0
      %638 = vmatprep.mubr.f32.mxu0 %v549
      %639 = vmatmul.mubr.f32.gmra.mrb[0].mxu0 %v532
      %v640 = vpop.f32.mrb[0].mxu0
      %v641 = vadd.f32 0.0, %v640
      %v642 = vpop.f32.mrb[0].mxu0
      %643 = vmatprep.mubr.f32.mxu0 %v552
      %644 = vmatmul.mubr.f32.gmra.mrb[0].mxu0 %v534
      %v645 = vpop.f32.mrb[0].mxu0
      %v646 = vadd.f32 0.0, %v645
      %v647 = vpop.f32.mrb[0].mxu0
      %648 = vmatprep.mubr.f32.mxu0 %v555
      %649 = vmatmul.mubr.f32.gmra.mrb[0].mxu0 %v536
      %v650 = vpop.f32.mrb[0].mxu0
      %v651 = vadd.f32 0.0, %v650
      %v652 = vpop.f32.mrb[0].mxu0
      %653 = vmatprep.mubr.f32.mxu0 %v558
      %654 = vmatmul.mubr.f32.gmra.mrb[0].mxu0 %v538
      %v655 = vpop.f32.mrb[0].mxu0
      %v656 = vadd.f32 0.0, %v655
      %v657 = vpop.f32.mrb[0].mxu0
      %658 = vmatprep.mubr.f32.mxu0 %v561
      %659 = vmatmul.mubr.f32.gmra.mrb[0].mxu0 %v540
      %v660 = vpop.f32.mrb[0].mxu0
      %v661 = vadd.f32 0.0, %v660
      %v662 = vpop.f32.mrb[0].mxu0
      %663 = vmatprep.mubr.f32.mxu0 %v564
      %664 = vmatmul.mubr.f32.gmra.mrb[0].mxu0 %v542
      %v665 = vpop.f32.mrb[0].mxu0
      %v666 = vadd.f32 0.0, %v665
      %v667 = vpop.f32.mrb[0].mxu0
      %668 = vdwg.mxu0
      %669 = vst [vmem:[%s197] sm:$0xff] %v636
      %670 = vst [vmem:[%s197 + $0x8] sm:$0xff] %v641
      %671 = vst [vmem:[%s197 + $0x10] sm:$0xff] %v646
      %672 = vst [vmem:[%s197 + $0x18] sm:$0xff] %v651
      %673 = vst [vmem:[%s197 + $0x20] sm:$0xff] %v656
      %674 = vst [vmem:[%s197 + $0x28] sm:$0xff] %v661
      %675 = vst [vmem:[%s197 + $0x30] sm:$0x1] %v666
      %p676 = scmp.lt.s32.totalorder %s15, 1
      %s677 = scalar_select %p676, %s15, 1
      %s678 = smul.addr %s677, 7
      %s679 = smul.addr %s678, 8
      %s680 = scalar_lea.vmem %s4, %s679
      // Predicated region
      $region37: #{tpu_custom_call.1} parent=35 // pred_check
        %p681 = pneg %p122
      $region38: #{tpu_custom_call.1} parent=35 // pred_check_branch
        %683 = sbr.rel (%p681) target = $region40
      $region39: #{tpu_custom_call.1} parent=35 // pred_region
        _
      $region40: #{tpu_custom_call.1} parent=35 // pred_fallthru
        _
    $region36: #{tpu_custom_call.1} parent=5 // pred_fallthru
      _
    %p684 = scmp.le.s32.totalorder 2, %s10
    // Predicated region
    $region41: #{tpu_custom_call.1} parent=5 // pred_check
      %p685 = pneg %p684
    $region42: #{tpu_custom_call.1} parent=5 // pred_check_branch
      %687 = sbr.rel (%p685) target = $region44
    $region43: #{tpu_custom_call.1} parent=5 // pred_region
      %s688 = ssub.s32 %s10, 2
      // Predicated region
      $region45: #{tpu_custom_call.1} parent=43 // pred_check
        %p689 = pneg %p128
      $region46: #{tpu_custom_call.1} parent=43 // pred_check_branch
        %691 = sbr.rel (%p689) target = $region48
      $region47: #{tpu_custom_call.1} parent=43 // pred_region
        %p692 = scmp.lt.s32.totalorder %s16, 1
        %s693 = scalar_select %p692, %s16, 1
        %s694 = smul.addr %s693, 7
        %s695 = smul.addr %s694, 8
        %s696 = scalar_lea.vmem %s4, %s695
      $region48: #{tpu_custom_call.1} parent=43 // pred_fallthru
        _
    $region44: #{tpu_custom_call.1} parent=5 // pred_fallthru
      _
  $region6: #{tpu_custom_call.1} parent=0 // loop_footer
    %s14 = sadd.s32 1, %s10
  $region7: #{tpu_custom_call.1} parent=0 // loop_footer_branch
    %9 = sbr.rel target = $region3
  $region8: #{tpu_custom_call.1} parent=0 // loop_exit
    _

</llo_original>
